<compile_context>
chip_gen: v5e
topology: v5e:2x2
jax: 0.10.0
libtpu: 0.0.40
codegen_flags: <defaults>
</compile_context>

<pallas_src>
import jax
import jax.numpy as jnp
import numpy as np
from jax.experimental import pallas as pl
from jax.experimental.pallas import tpu as pltpu


def _ace_kernel(probs_ref, labels_ref, out_ref):
    """One grid step = one batch block.

    probs_ref:  (Bb, T, C) logits in their native HBM dtype
    labels_ref: (Bb, C)    f32 class counts (labels[:, 0] = text length)
    out_ref:    (Bb, C)    f32 per-(batch, class) contribution log(norm_y) * norm_n
    """
    # Cast per tile; compute stays in f32 (v5e VPU/EUP have no bf16 paths anyway).
    x = probs_ref[...].astype(jnp.float32)                      # (Bb, T, C)
    T = x.shape[1]
    inv_T = 1.0 / T

    # Numerically stable softmax over the class axis.
    m = jnp.max(x, axis=-1, keepdims=True)                      # (Bb, T, 1)
    e = jnp.exp(x - m)                                          # (Bb, T, C)
    inv_denom = 1.0 / jnp.sum(e, axis=-1, keepdims=True)        # (Bb, T, 1): one recip per row
    p = e * inv_denom                                           # (Bb, T, C): mul, not divide

    # Aggregate over time. The original adds 1e-10 to every prob before the T-sum;
    # sum_t(p + 1e-10)/T == sum_t(p)/T + 1e-10, so fold the eps in after the sum.
    norm_y = jnp.sum(p, axis=1) * inv_T + 1e-10                 # (Bb, C)

    # Labels with class 0 replaced by (T - text_length), normalized by T.
    lbl = labels_ref[...].astype(jnp.float32)                   # (Bb, C)
    cls_idx = jax.lax.broadcasted_iota(jnp.int32, lbl.shape, 1)
    adj = jnp.where(cls_idx == 0, T - lbl, lbl)
    norm_n = adj * inv_T

    # Per-(batch, class) partials; the -sum/B reduction happens in the wrapper.
    out_ref[...] = jnp.log(norm_y) * norm_n


def ace_loss(probs, labels):
    """probs: (B, T, C) logits (any float dtype); labels: (B, C) counts. Returns scalar f32 loss."""
    B, T, C = probs.shape
    labels = labels.astype(jnp.float32)

    # Pick the biggest batch block that divides B and keeps the double-buffered input tile
    # plus its in-kernel f32 working copies well inside VMEM on every generation
    # (v7x per-TC VMEM is 64 MiB with a 32 MiB default scoped limit).
    itemsize = jnp.dtype(probs.dtype).itemsize
    per_row_bytes = T * C * max(itemsize, 4)        # count the f32 working set, not just the DMA tile
    max_bb = max(1, (4 << 20) // per_row_bytes)     # ~4 MiB of rows per buffer
    bb = 1
    for cand in range(min(B, max_bb), 0, -1):
        if B % cand == 0:
            bb = cand
            break
    # TODO(synk): for very large T, add an innermost "arbitrary" T grid axis accumulating
    # sum_t(p) into a (bb, C) VMEM scratch so bb can stay large with bounded VMEM.

    partials = pl.pallas_call(
        _ace_kernel,
        out_shape=jax.ShapeDtypeStruct((B, C), jnp.float32),
        grid_spec=pltpu.PrefetchScalarGridSpec(
            num_scalar_prefetch=0,
            grid=(B // bb,),
            in_specs=[
                pl.BlockSpec((bb, T, C), lambda i: (i, 0, 0)),   # native dtype DMA
                pl.BlockSpec((bb, C), lambda i: (i, 0)),
            ],
            out_specs=pl.BlockSpec((bb, C), lambda i: (i, 0)),
        ),
        compiler_params=pltpu.CompilerParams(
            # Every grid step owns its own output block -> batch axis is truly parallel
            # (lets v7x shard the grid across its 2 TensorCores; harmless on v5e/v6e).
            dimension_semantics=("parallel",),
            vmem_limit_bytes=48 << 20,
        ),
    )(probs, labels)

    # Final reduction over a tiny (B, C) tensor in plain JAX.
    return -jnp.sum(partials) / B


def ace_loss_ref(probs, labels):
    """Pure-JAX reference matching the PyTorch forward semantics."""
    B, T, C = probs.shape
    p = jax.nn.softmax(probs.astype(jnp.float32), axis=-1) + 1e-10
    lbl = labels.astype(jnp.float32)
    lbl = lbl.at[:, 0].set(T - lbl[:, 0])
    norm_y = jnp.sum(p, axis=1) / T
    norm_n = lbl / T
    return -jnp.sum(jnp.log(norm_y) * norm_n) / B


if __name__ == "__main__":
    # Deterministic "character set" (module __init__ arg): 31 chars + [blank] -> C = 32.
    character = list("abcdefghijklmnopqrstuvwxyz01234")
    num_class = len(character) + 1  # +1 for [blank] prepended in __init__

    B, T, C = 2, 8, num_class

    key = jax.random.PRNGKey(0)
    k_probs, k_lbl = jax.random.split(key)

    # Logits for softmax.
    probs = jax.random.normal(k_probs, (B, T, C), dtype=jnp.float32)

    # Synthetic annotation counts (as produced by encode()): per-class counts,
    # class 0 holds the total text length.
    counts = jax.random.randint(k_lbl, (B, C), 0, 2).astype(jnp.float32)
    counts = counts.at[:, 0].set(jnp.sum(counts[:, 1:], axis=1))
    labels = counts

    # f32 path.
    loss = ace_loss(probs, labels)
    jax.block_until_ready(loss)
    ref = ace_loss_ref(probs, labels)
    assert np.allclose(np.asarray(loss), np.asarray(ref), rtol=1e-5, atol=1e-5), (
        f"f32 mismatch: kernel={float(loss)} ref={float(ref)}"
    )

    # Native bf16-in-HBM path (no wrapper upcast; kernel casts per tile).
    probs_bf16 = probs.astype(jnp.bfloat16)
    loss_bf16 = ace_loss(probs_bf16, labels)
    jax.block_until_ready(loss_bf16)
    ref_bf16 = ace_loss_ref(probs_bf16, labels)
    assert np.allclose(np.asarray(loss_bf16), np.asarray(ref_bf16), rtol=1e-4, atol=1e-4), (
        f"bf16 mismatch: kernel={float(loss_bf16)} ref={float(ref_bf16)}"
    )

    print("KERNEL_OK")
</pallas_src>

<mosaic_0001>
module attributes {stable_mosaic.version = 11 : i64} {
  func.func @_ace_kernel(%arg0: i32, %arg1: memref<2x8x32xf32, #tpu.memory_space<vmem>>, %arg2: memref<2x32xf32, #tpu.memory_space<vmem>>, %arg3: memref<2x32xf32, #tpu.memory_space<vmem>>) attributes {dimension_semantics = [#tpu.dimension_semantics<parallel>], iteration_bounds = array<i64: 1>, scalar_prefetch = 0 : i64, scratch_operands = 0 : i64, tpu.core_type = #tpu.core_type<tc>, window_params = [{transform_indices = @transform_0, window_bounds = array<i64: 2, 8, 32>}, {transform_indices = @transform_1, window_bounds = array<i64: 2, 32>}, {transform_indices = @transform_2, window_bounds = array<i64: 2, 32>}]} {
    %c0 = arith.constant 0 : index
    %c0_0 = arith.constant 0 : index
    %c0_1 = arith.constant 0 : index
    %0 = vector.load %arg1[%c0, %c0_0, %c0_1] : memref<2x8x32xf32, #tpu.memory_space<vmem>>, vector<2x8x32xf32>
    %cst = arith.constant dense<0xFF800000> : vector<2x8xf32>
    %1 = vector.multi_reduction <maximumf>, %0, %cst [2] : vector<2x8x32xf32> to vector<2x8xf32>
    %2 = vector.shape_cast %1 : vector<2x8xf32> to vector<2x8x1xf32>
    %3 = vector.broadcast %2 : vector<2x8x1xf32> to vector<2x8x32xf32>
    %4 = arith.subf %0, %3 : vector<2x8x32xf32>
    %5 = math.exp %4 : vector<2x8x32xf32>
    %cst_2 = arith.constant dense<0.000000e+00> : vector<2x8xf32>
    %6 = vector.multi_reduction <add>, %5, %cst_2 [2] : vector<2x8x32xf32> to vector<2x8xf32>
    %7 = vector.shape_cast %6 : vector<2x8xf32> to vector<2x8x1xf32>
    %cst_3 = arith.constant 1.000000e+00 : f32
    %8 = vector.broadcast %cst_3 : f32 to vector<2x8x1xf32>
    %9 = arith.divf %8, %7 : vector<2x8x1xf32>
    %10 = vector.broadcast %9 : vector<2x8x1xf32> to vector<2x8x32xf32>
    %11 = arith.mulf %5, %10 : vector<2x8x32xf32>
    %cst_4 = arith.constant dense<0.000000e+00> : vector<2x32xf32>
    %12 = vector.multi_reduction <add>, %11, %cst_4 [1] : vector<2x8x32xf32> to vector<2x32xf32>
    %cst_5 = arith.constant 1.250000e-01 : f32
    %13 = vector.broadcast %cst_5 : f32 to vector<2x32xf32>
    %14 = arith.mulf %12, %13 : vector<2x32xf32>
    %cst_6 = arith.constant 1.000000e-10 : f32
    %15 = vector.broadcast %cst_6 : f32 to vector<2x32xf32>
    %16 = arith.addf %14, %15 : vector<2x32xf32>
    %c0_7 = arith.constant 0 : index
    %c0_8 = arith.constant 0 : index
    %17 = vector.load %arg2[%c0_7, %c0_8] : memref<2x32xf32, #tpu.memory_space<vmem>>, vector<2x32xf32>
    %18 = tpu.iota {dimensions = array<i32: 1>} : vector<2x32xi32>
    %c0_i32 = arith.constant 0 : i32
    %19 = vector.broadcast %c0_i32 : i32 to vector<2x32xi32>
    %20 = arith.cmpi eq, %18, %19 : vector<2x32xi32>
    %cst_9 = arith.constant 8.000000e+00 : f32
    %21 = vector.broadcast %cst_9 : f32 to vector<2x32xf32>
    %22 = arith.subf %21, %17 : vector<2x32xf32>
    %23 = arith.select %20, %22, %17 : vector<2x32xi1>, vector<2x32xf32>
    %cst_10 = arith.constant 1.250000e-01 : f32
    %24 = vector.broadcast %cst_10 : f32 to vector<2x32xf32>
    %25 = arith.mulf %23, %24 : vector<2x32xf32>
    %26 = math.log %16 : vector<2x32xf32>
    %27 = arith.mulf %26, %25 : vector<2x32xf32>
    %c0_11 = arith.constant 0 : index
    %c0_12 = arith.constant 0 : index
    %28 = vector.load %arg3[%c0_11, %c0_12] : memref<2x32xf32, #tpu.memory_space<vmem>>, vector<2x32xf32>
    tpu.vector_store %arg3[%c0_11, %c0_12], %27 {strides = array<i32>} : memref<2x32xf32, #tpu.memory_space<vmem>>, vector<2x32xf32>,
    return
  }
  func.func @transform_0(%arg0: i32) -> (i32, i32, i32) {
    %c0_i32 = arith.constant 0 : i32
    %c0_i32_0 = arith.constant 0 : i32
    %c0_i32_1 = arith.constant 0 : i32
    return %arg0, %c0_i32, %c0_i32_0 : i32, i32, i32
  }
  func.func @transform_1(%arg0: i32) -> (i32, i32) {
    %c0_i32 = arith.constant 0 : i32
    %c0_i32_0 = arith.constant 0 : i32
    return %arg0, %c0_i32 : i32, i32
  }
  func.func @transform_2(%arg0: i32) -> (i32, i32) {
    %c0_i32 = arith.constant 0 : i32
    %c0_i32_0 = arith.constant 0 : i32
    return %arg0, %c0_i32 : i32, i32
  }
}

</mosaic_0001>

<llo_original>
// kernel: tpu_custom_call.1
$region0: #{tpu_custom_call.1}
  #allocation0 [shape = 'u32[]', space=smem, size = 0x4, offset = 0x4, fixed_abs, tag = 'smem constant byte address 0x4 - core index']
  #allocation1 [shape = 'u32[72,128]{1,0:T(1,128)}', space=vmem, size = 0x9000, scoped, tag = 'internal scratch']
  %s0 = inlined_call_operand.hbm [shape: f32[2,8,32], index: 0, kind: input, shape index: {}]
  %s1 = inlined_call_operand.hbm [shape: f32[2,32], index: 1, kind: input, shape index: {}]
  %s2 = inlined_call_operand.hbm [shape: f32[2,32], index: 2, kind: output, shape index: {}]
  %s3 = sld [smem:[#allocation0]]
  $region26: #{tpu_custom_call.1} parent=0
    _
  %s5 = ssub.s32 1, %s3
  %s6 = scalar_select 0, %s5, %s3
  $region1: #{tpu_custom_call.1} parent=0
    #allocation2 [shape = 'u8[8192]{0}', space=vmem, size = 0x2000, scoped, tag = 'input window, operand 0, single buffered']
    #allocation3 [shape = 's32[1]{0}', space=sflag, size = 0x4, scoped, tag = 'scoped memory for tpu_custom_call.1']
    #allocation4 [shape = 's32[1]{0}', space=sflag, size = 0x4, scoped, tag = 'scoped memory for tpu_custom_call.1']
    #allocation5 [shape = 'u8[1024]{0}', space=vmem, size = 0x400, scoped, tag = 'input window, operand 1, single buffered']
    #allocation6 [shape = 's32[1]{0}', space=sflag, size = 0x4, scoped, tag = 'scoped memory for tpu_custom_call.1']
    #allocation7 [shape = 'u8[1024]{0}', space=vmem, size = 0x400, scoped, tag = 'output window, operand 0, single buffered']
    %7 = vsyncpa [#allocation3], 0
    %8 = vsyncpa [#allocation6], 0
    %9 = vsyncpa [#allocation4], 0
    // Predicated region
    $region2: #{tpu_custom_call.1} parent=1 // pred_check
      _
    $region3: #{tpu_custom_call.1} parent=1 // pred_check_branch
      %11 = sbr.rel (0) target = $region5
    $region4: #{tpu_custom_call.1} parent=1 // pred_region
      %13 = vsyncadd [#allocation3], 0
      %s14 = sshll.u32 %s0, 4
      %s15 = int_to_ptr.hbm [resolvable:$true] %s14
      %s16 = sshll.u32 [#allocation2], 4
      %s17 = int_to_ptr.vmem [resolvable:$true] %s16
      %22 = dma.hbm_to_vmem [thread:$0]  %s15, 256, %s17, [#allocation3], 128, 128, 8
    $region5: #{tpu_custom_call.1} parent=1 // pred_fallthru
      _
    // Predicated region
    $region6: #{tpu_custom_call.1} parent=1 // pred_check
      _
    $region7: #{tpu_custom_call.1} parent=1 // pred_check_branch
      %24 = sbr.rel (0) target = $region9
    $region8: #{tpu_custom_call.1} parent=1 // pred_region
      %26 = vsyncadd [#allocation6], 0
      %s28 = sshll.u32 %s1, 4
      %s29 = int_to_ptr.hbm [resolvable:$true] %s28
      %s30 = sshll.u32 [#allocation5], 4
      %s31 = int_to_ptr.vmem [resolvable:$true] %s30
      %33 = dma.hbm_to_vmem [thread:$0]  %s29, 32, %s31, [#allocation6]
    $region9: #{tpu_custom_call.1} parent=1 // pred_fallthru
      _
    // Predicated region
    $region10: #{tpu_custom_call.1} parent=1 // pred_check
      _
    $region11: #{tpu_custom_call.1} parent=1 // pred_check_branch
      %35 = sbr.rel (0) target = $region13
    $region12: #{tpu_custom_call.1} parent=1 // pred_region
      %37 = dma.done [#allocation3], 256
    $region13: #{tpu_custom_call.1} parent=1 // pred_fallthru
      _
    // Predicated region
    $region14: #{tpu_custom_call.1} parent=1 // pred_check
      _
    $region15: #{tpu_custom_call.1} parent=1 // pred_check_branch
      %39 = sbr.rel (0) target = $region17
    $region16: #{tpu_custom_call.1} parent=1 // pred_region
      %41 = dma.done [#allocation6], 32
    $region17: #{tpu_custom_call.1} parent=1 // pred_fallthru
      _
    %v42 = vld [vmem:[#allocation2] sm:$0xff]
    %v43 = vld [vmem:[#allocation2 + $0x8] sm:$0xff]
    %vm44 = vcmask 261120
    %v45 = vsel %vm44, %v42, -inf
    %46 = vmax.xlane.f32.xlu0 %v45
    %v47 = vpop.xlane.xlu0 %46
    %v48 = vsel %vm44, %v43, -inf
    %49 = vmax.xlane.f32.xlu0 %v48
    %v50 = vpop.xlane.xlu0 %49
    %v51 = vsub.f32 %v42, %v47
    %v52 = vsub.f32 %v43, %v50
    %v53 = vmul.f32 %v51, 1.442695
    %v54 = vpow.pop %v53
    %v55 = vmul.f32 %v52, 1.442695
    %v56 = vpow.pop %v55
    %v57 = vsel %vm44, %v54, 0.0
    %58 = vadd.xlane.f32.xlu0 %v57
    %v59 = vpop.xlane.xlu0 %58
    %v60 = vsel %vm44, %v56, 0.0
    %61 = vadd.xlane.f32.xlu0 %v60
    %v62 = vpop.xlane.xlu0 %61
    %v63 = vrcp.pop %v59
    %v64 = vmul.f32 %v59, %v63
    %v65 = vsub.f32 1.0, %v64
    %v66 = vmul.f32 %v63, %v65
    %v67 = vadd.f32 %v63, %v66
    %vm68 = vweird.f32 %v59
    %vm69 = vweird.f32 %v63
    %vm70 = vmor %vm68, %vm69
    %v71 = vsel %vm70, %v63, %v67
    %v72 = vand.u32 2147483647, %v59
    %vm73 = vcmp.eq.f32.partialorder %v72, 8.507059e+37
    %v74 = vand.u32 %v59, 2147483648
    %v75 = vor.u32 1.1754944e-38, %v74
    %v76 = vsel %vm73, %v75, %v71
    %v77 = vmul.f32 1.0, %v76
    %v78 = vrcp.pop %v62
    %v79 = vmul.f32 %v62, %v78
    %v80 = vsub.f32 1.0, %v79
    %v81 = vmul.f32 %v78, %v80
    %v82 = vadd.f32 %v78, %v81
    %vm83 = vweird.f32 %v62
    %vm84 = vweird.f32 %v78
    %vm85 = vmor %vm83, %vm84
    %v86 = vsel %vm85, %v78, %v82
    %v87 = vand.u32 2147483647, %v62
    %vm88 = vcmp.eq.f32.partialorder %v87, 8.507059e+37
    %v89 = vand.u32 %v62, 2147483648
    %v90 = vor.u32 1.1754944e-38, %v89
    %v91 = vsel %vm88, %v90, %v86
    %v92 = vmul.f32 1.0, %v91
    %v93 = vmul.f32 %v54, %v77
    %v94 = vmul.f32 %v56, %v92
    %v95 = vsel %vm44, %v93, 0.0
    %v96 = vrot.slane %v95, 4
    %v97 = vadd.f32 %v95, %v96
    %v98 = vrot.slane %v97, 2
    %v99 = vadd.f32 %v97, %v98
    %v100 = vrot.slane %v99, 1
    %v101 = vadd.f32 %v99, %v100
    %v102 = vsel %vm44, %v94, 0.0
    %v103 = vrot.slane %v102, 4
    %v104 = vadd.f32 %v102, %v103
    %v105 = vrot.slane %v104, 2
    %v106 = vadd.f32 %v104, %v105
    %v107 = vrot.slane %v106, 1
    %v108 = vadd.f32 %v106, %v107
    %v109 = vmul.f32 %v101, 0.125
    %v110 = vmul.f32 %v108, 0.125
    %v111 = vadd.f32 %v109, 1e-10
    %v112 = vadd.f32 %v110, 1e-10
    %v113 = vld [vmem:[#allocation5] sm:$0x3]
    %v114 = vlaneseq
    %v115 = vand.u32 %v114, 127
    %vm116 = vcmp.eq.s32.totalorder %v115, 0
    %v117 = vsub.f32 8.0, %v113
    %v118 = vsel %vm116, %v117, %v113
    %v119 = vmul.f32 %v118, 0.125
    %v120 = vlog2.pop %v111
    %v121 = vmul.f32 %v120, 0.6931472
    %v122 = vlog2.pop %v112
    %v123 = vmul.f32 %v122, 0.6931472
    %v125 = vrot.slane %v119, 1
    %v128 = vmul.f32 %v121, %v119
    %v129 = vmul.f32 %v123, %v125
    %v132 = vrot.slane %v129, 7
    %vm133 = vcmask 1041409
    %v134 = vsel %vm133, %v132, %v128
    %vm136 = vcmask 254976
    %137 = vst.msk [vmem:[#allocation7] sm:$0x3] %vm136, %v134
    // Predicated region
    $region18: #{tpu_custom_call.1} parent=1 // pred_check
      _
    $region19: #{tpu_custom_call.1} parent=1 // pred_check_branch
      %139 = sbr.rel (0) target = $region21
    $region20: #{tpu_custom_call.1} parent=1 // pred_region
      %141 = vsyncadd [#allocation4], 0
      %s143 = sshll.u32 [#allocation7], 4
      %s144 = int_to_ptr.vmem [resolvable:$true] %s143
      %s145 = sshll.u32 %s2, 4
      %s146 = int_to_ptr.hbm [resolvable:$true] %s145
      %148 = dma.vmem_to_hbm [thread:$0]  %s144, 32, %s146, [#allocation4]
    $region21: #{tpu_custom_call.1} parent=1 // pred_fallthru
      _
    // Predicated region
    $region22: #{tpu_custom_call.1} parent=1 // pred_check
      _
    $region23: #{tpu_custom_call.1} parent=1 // pred_check_branch
      %150 = sbr.rel (0) target = $region25
    $region24: #{tpu_custom_call.1} parent=1 // pred_region
      %152 = dma.done [#allocation4], 32
    $region25: #{tpu_custom_call.1} parent=1 // pred_fallthru
      _
    %153 = vsyncpa [#allocation3], 1
    %154 = vsyncpa [#allocation6], 1
    %155 = vsyncpa [#allocation4], 1

</llo_original>
